<compile_context>
chip_gen: v5e
topology: v5e:2x2
jax: 0.10.0
libtpu: 0.0.40
codegen_flags: <defaults>
</compile_context>

<pallas_src>
import jax
import jax.numpy as jnp
from jax import lax
from jax.experimental import pallas as pl
from jax.experimental.pallas import tpu as pltpu

EPS = 1e-5                       # PyTorch LayerNorm default eps
INV_SQRT2 = 0.7071067811865476   # 1/sqrt(2) for exact (erf) GELU


def _round_up(n, m):
    return ((n + m - 1) // m) * m


def _vmem_capacity_bytes():
    # 128 MiB on v5e/v6e, 64 MiB per TensorCore on v7x.
    try:
        return int(pltpu.get_tpu_info().vmem_capacity_bytes)
    except Exception:
        return 64 * 1024 * 1024   # conservative (v7x per-core)


def _layernorm(x, gamma, beta):
    # One-pass variance (E[x^2] - E[x]^2): fewer VALU ops / lower vreg pressure
    # on the (TB*S, C) slab than centering before the second reduce.
    mu = jnp.mean(x, axis=-1, keepdims=True)
    ms = jnp.mean(x * x, axis=-1, keepdims=True)
    var = jnp.maximum(ms - mu * mu, 0.0)
    return (x - mu) * lax.rsqrt(var + EPS) * gamma + beta


def _make_kernel(matmul_dtype, approx_softmax, gelu_tanh, s_valid):
    def kernel(x_ref, ln1_g_ref, ln1_b_ref, w1_ref, w2_ref,
               ln2_g_ref, ln2_b_ref, wh_ref, bh_ref, out_ref):
        tb, s_pad, C = x_ref.shape
        # Stream x in its native dtype; upcast once to f32 for all elementwise
        # work (LN / GELU / softmax / pooling).
        x = x_ref[...].astype(jnp.float32)                # (TB, S_pad, C)
        x2 = x.reshape(tb * s_pad, C)                     # layout-preserving (S_pad % 8 == 0)

        # --- attention branch: LN -> Linear(C,C no bias) on MXU -> GELU ---
        h = _layernorm(x2, ln1_g_ref[...], ln1_b_ref[...])              # (TB*S, C) f32
        h = jnp.dot(h.astype(matmul_dtype), w1_ref[...],
                    preferred_element_type=jnp.float32)                 # f32 accumulation
        if gelu_tanh:
            h = jax.nn.gelu(h, approximate=True)                        # EUP tanh (opt-in)
        else:
            h = 0.5 * h * (1.0 + lax.erf(h * INV_SQRT2))                # PyTorch-exact GELU

        # --- Linear(C,1) as VPU multiply + lane reduce; bias cancels in the
        #     softmax over the sequence axis -> dropped.  Lane-dense (TB, S). ---
        s = jnp.sum((h * w2_ref[...]).reshape(tb, s_pad, C), axis=-1)   # (TB, S_pad)
        if s_pad != s_valid:                                            # mask padded positions
            pos = lax.broadcasted_iota(jnp.int32, (tb, s_pad), 1)
            s = jnp.where(pos < s_valid, s, -jnp.inf)

        # --- softmax over the sequence (lane) axis, f32 ---
        s = s - jnp.max(s, axis=-1, keepdims=True)
        e = jnp.exp(s)
        denom = jnp.sum(e, axis=-1, keepdims=True)                      # (TB, 1)
        if approx_softmax:
            w = e * pl.reciprocal(denom, approx=True)                   # EUP slot
        else:
            w = e / denom

        # --- attention pooling: weighted sum over the sequence axis ---
        pooled = jnp.sum(w[..., None] * x, axis=1)                      # (TB, C)

        # --- head: LN -> Linear(C, NC_pad), lane-dense store ---
        p = _layernorm(pooled, ln2_g_ref[...], ln2_b_ref[...])
        out_ref[...] = (jnp.dot(p.astype(matmul_dtype), wh_ref[...],
                                preferred_element_type=jnp.float32)
                        + bh_ref[...])
    return kernel


def _per_b_bytes(s_pad, C, nc_pad, x_itemsize, mm_itemsize):
    # Conservative per-batch-element resident VMEM: x tile (double-buffered,
    # streamed dtype) + f32 upcast of x (live through pooling) + f32 h slab +
    # its matmul-dtype cast + softmax temporaries + out tile (double-buffered).
    return (s_pad * C * (2 * x_itemsize + 4 + 4 + mm_itemsize)
            + 8 * s_pad + 2 * nc_pad * 4)


def _weight_bytes(C, nc_pad, mm_itemsize):
    # w1 + wh in matmul dtype, LN params / w2 / bh in f32 — double-buffered by
    # default (pass single_buffer_weights=True on v7x with large C to halve).
    return 2 * (mm_itemsize * C * (C + nc_pad) + 4 * (8 * C + nc_pad))


def _choose_tiling(B, s_pad, per_b, weights, vmem_cap):
    budget = vmem_cap - weights - (2 << 20)          # slack for misc scratch
    tb_vmem = max(1, budget // per_b)
    tb_rows = max(1, pl.cdiv(1024, s_pad))           # ~1024 rows in the (TB*S, C) MXU slab
    tb_max = max(1, min(tb_vmem, tb_rows))

    # Tiny batches: one tile, no pad (splitting below 8 rows would misalign the
    # output block and padding would cost more HBM traffic than it saves).
    if B <= 8 or (B < 16 and B <= tb_vmem):
        return B, B

    # Otherwise pad the batch to a multiple of 8 (at most 7 extra rows) and pick
    # the largest multiple-of-8 divisor that fits VMEM / the row target while
    # keeping grid >= 2 so both v7x TensorCores get work.
    b_pad = _round_up(B, 8)
    tb = 8
    d = 16
    while d <= min(tb_max, b_pad // 2):
        if b_pad % d == 0:
            tb = d
        d += 8
    return tb, b_pad


def attention_pooler(x, params, *, matmul_dtype=jnp.bfloat16,
                     approx_softmax=True, gelu="erf", tb=None,
                     single_buffer_weights=False):
    """x: (B, S, C), any float dtype (bf16 recommended for the HBM-bound stream).
    Returns (B, num_classes) float32."""
    B, S, C = x.shape
    NC = params["wh"].shape[1]
    nc_pad = _round_up(NC, 128)                      # lane-dense output store
    s_pad = _round_up(S, 8)                          # layout-preserving reshape

    x_itemsize = jnp.dtype(x.dtype).itemsize
    mm_itemsize = jnp.dtype(matmul_dtype).itemsize
    vmem_cap = _vmem_capacity_bytes()
    per_b = _per_b_bytes(s_pad, C, nc_pad, x_itemsize, mm_itemsize)
    weights = _weight_bytes(C, nc_pad, mm_itemsize)

    if tb is None:
        tb, b_pad = _choose_tiling(B, s_pad, per_b, weights, vmem_cap)
    else:
        b_pad = _round_up(B, tb)
    grid = b_pad // tb

    # Pad only when unavoidable (a wrapper pad is an extra HBM pass over x).
    if b_pad != B or s_pad != S:
        x = jnp.pad(x, ((0, b_pad - B), (0, s_pad - S), (0, 0)))

    w1 = params["w1"].astype(matmul_dtype)                               # (C, C)
    w2 = params["w2"].astype(jnp.float32)                                # (1, C), VPU path
    wh = jnp.pad(params["wh"], ((0, 0), (0, nc_pad - NC))).astype(matmul_dtype)
    bh = jnp.pad(params["bh"], ((0, 0), (0, nc_pad - NC))).astype(jnp.float32)
    ln1_g = params["ln1_g"].astype(jnp.float32)
    ln1_b = params["ln1_b"].astype(jnp.float32)
    ln2_g = params["ln2_g"].astype(jnp.float32)
    ln2_b = params["ln2_b"].astype(jnp.float32)

    kernel = _make_kernel(matmul_dtype, approx_softmax, gelu == "tanh", S)

    # Grid-invariant operands; on v7x with large C set single_buffer_weights to
    # drop their default 2-deep buffering (pl.Buffered(1)) and free VMEM.
    const_kw = dict(pipeline_mode=pl.Buffered(1)) if single_buffer_weights else {}
    const2d = lambda b: (0, 0)

    def cspec(shape):
        return pl.BlockSpec(shape, const2d, **const_kw)

    est_bytes = tb * per_b + weights + (2 << 20)
    vmem_limit = int(min(vmem_cap, max(32 << 20, est_bytes)))

    out = pl.pallas_call(
        kernel,
        out_shape=jax.ShapeDtypeStruct((b_pad, nc_pad), jnp.float32),
        grid_spec=pltpu.PrefetchScalarGridSpec(
            num_scalar_prefetch=0,
            grid=(grid,),
            in_specs=[
                pl.BlockSpec((tb, s_pad, C), lambda b: (b, 0, 0)),   # x tile (streamed dtype)
                cspec((1, C)),                                       # attention LN gamma
                cspec((1, C)),                                       # attention LN beta
                cspec((C, C)),                                       # Linear(C,C) weight
                cspec((1, C)),                                       # Linear(C,1) weight (row)
                cspec((1, C)),                                       # head LN gamma
                cspec((1, C)),                                       # head LN beta
                cspec((C, nc_pad)),                                  # head weight (lane-padded)
                cspec((1, nc_pad)),                                  # head bias (lane-padded)
            ],
            out_specs=pl.BlockSpec((tb, nc_pad), lambda b: (b, 0)),
        ),
        compiler_params=pltpu.CompilerParams(
            dimension_semantics=("parallel",),       # megacore / v7x 2-TC sharding
            vmem_limit_bytes=vmem_limit),
    )(x, ln1_g, ln1_b, w1, w2, ln2_g, ln2_b, wh, bh)

    return out[:B, :NC]


def reference(x, p):
    # Pure-JAX f32 reference matching the PyTorch module (incl. the w2 bias).
    def ln(v, g, b):
        mu = jnp.mean(v, axis=-1, keepdims=True)
        var = jnp.mean(jnp.square(v - mu), axis=-1, keepdims=True)
        return (v - mu) * lax.rsqrt(var + EPS) * g + b

    h = ln(x, p["ln1_g"], p["ln1_b"])
    h = h @ p["w1"]
    h = 0.5 * h * (1.0 + lax.erf(h * INV_SQRT2))
    s = jnp.sum(h * p["w2"], axis=-1, keepdims=True) + p["b2"][0, 0]   # (B, S, 1)
    w = jax.nn.softmax(s, axis=1)
    pooled = jnp.sum(w * x, axis=1)                                    # (B, C)
    pooled = ln(pooled, p["ln2_g"], p["ln2_b"])
    return pooled @ p["wh"] + p["bh"]


def init_params(key, C, NC):
    ks = jax.random.split(key, 6)
    return {
        "ln1_g": jnp.ones((1, C), jnp.float32),
        "ln1_b": jnp.zeros((1, C), jnp.float32),
        "w1": 0.05 * jax.random.normal(ks[0], (C, C), jnp.float32),
        "w2": 0.05 * jax.random.normal(ks[1], (1, C), jnp.float32),   # Linear(C,1) weight as row
        "b2": 0.01 * jax.random.normal(ks[2], (1, 1), jnp.float32),   # cancels in softmax (ref only)
        "ln2_g": jnp.ones((1, C), jnp.float32),
        "ln2_b": jnp.zeros((1, C), jnp.float32),
        "wh": 0.05 * jax.random.normal(ks[3], (C, NC), jnp.float32),
        "bh": 0.01 * jax.random.normal(ks[4], (1, NC), jnp.float32),
    }


if __name__ == "__main__":
    # Small shapes consistent with the module's forward: (batch, seq, in_channels)
    B, S, C, NC = 2, 8, 32, 2
    key = jax.random.PRNGKey(0)
    kx, kp = jax.random.split(key)
    x = jax.random.normal(kx, (B, S, C), jnp.float32)
    params = init_params(kp, C, NC)

    ref = reference(x, params)

    # Exact path (f32 MXU inputs, exact softmax division): tight check.
    out_exact = attention_pooler(x, params, matmul_dtype=jnp.float32,
                                 approx_softmax=False)
    out_exact = jax.block_until_ready(out_exact)
    assert out_exact.shape == (B, NC)
    assert jnp.allclose(out_exact, ref, atol=1e-4, rtol=1e-4), (out_exact, ref)

    # Fast path: x streamed as bf16 (halves HBM traffic on the mem-bound x
    # stream), bf16 MXU inputs / f32 accumulation, approx softmax reciprocal.
    # Compared against the reference evaluated on the same bf16-rounded input.
    x_bf16 = x.astype(jnp.bfloat16)
    ref_bf16_in = reference(x_bf16.astype(jnp.float32), params)
    out_fast = attention_pooler(x_bf16, params)
    out_fast = jax.block_until_ready(out_fast)
    assert out_fast.shape == (B, NC)
    assert jnp.allclose(out_fast, ref_bf16_in, atol=2e-2, rtol=2e-2), (out_fast, ref_bf16_in)

    print("KERNEL_OK")
</pallas_src>

<mosaic_0001>
module attributes {stable_mosaic.version = 11 : i64} {
  func.func @kernel(%arg0: i32, %arg1: memref<2x8x32xf32, #tpu.memory_space<vmem>>, %arg2: memref<1x32xf32, #tpu.memory_space<vmem>>, %arg3: memref<1x32xf32, #tpu.memory_space<vmem>>, %arg4: memref<32x32xf32, #tpu.memory_space<vmem>>, %arg5: memref<1x32xf32, #tpu.memory_space<vmem>>, %arg6: memref<1x32xf32, #tpu.memory_space<vmem>>, %arg7: memref<1x32xf32, #tpu.memory_space<vmem>>, %arg8: memref<32x128xf32, #tpu.memory_space<vmem>>, %arg9: memref<1x128xf32, #tpu.memory_space<vmem>>, %arg10: memref<2x128xf32, #tpu.memory_space<vmem>>) attributes {dimension_semantics = [#tpu.dimension_semantics<parallel>], iteration_bounds = array<i64: 1>, scalar_prefetch = 0 : i64, scratch_operands = 0 : i64, tpu.core_type = #tpu.core_type<tc>, window_params = [{transform_indices = @transform_0, window_bounds = array<i64: 2, 8, 32>}, {pipeline_mode = #tpu.pipeline_mode<synchronous>, transform_indices = @transform_1, window_bounds = array<i64: 1, 32>}, {pipeline_mode = #tpu.pipeline_mode<synchronous>, transform_indices = @transform_2, window_bounds = array<i64: 1, 32>}, {pipeline_mode = #tpu.pipeline_mode<synchronous>, transform_indices = @transform_3, window_bounds = array<i64: 32, 32>}, {pipeline_mode = #tpu.pipeline_mode<synchronous>, transform_indices = @transform_4, window_bounds = array<i64: 1, 32>}, {pipeline_mode = #tpu.pipeline_mode<synchronous>, transform_indices = @transform_5, window_bounds = array<i64: 1, 32>}, {pipeline_mode = #tpu.pipeline_mode<synchronous>, transform_indices = @transform_6, window_bounds = array<i64: 1, 32>}, {pipeline_mode = #tpu.pipeline_mode<synchronous>, transform_indices = @transform_7, window_bounds = array<i64: 32, 128>}, {pipeline_mode = #tpu.pipeline_mode<synchronous>, transform_indices = @transform_8, window_bounds = array<i64: 1, 128>}, {transform_indices = @transform_9, window_bounds = array<i64: 2, 128>}]} {
    %c0 = arith.constant 0 : index
    %c0_0 = arith.constant 0 : index
    %c0_1 = arith.constant 0 : index
    %0 = vector.load %arg1[%c0, %c0_0, %c0_1] : memref<2x8x32xf32, #tpu.memory_space<vmem>>, vector<2x8x32xf32>
    %1 = vector.shape_cast %0 : vector<2x8x32xf32> to vector<16x32xf32>
    %c0_2 = arith.constant 0 : index
    %c0_3 = arith.constant 0 : index
    %2 = vector.load %arg2[%c0_2, %c0_3] : memref<1x32xf32, #tpu.memory_space<vmem>>, vector<1x32xf32>
    %c0_4 = arith.constant 0 : index
    %c0_5 = arith.constant 0 : index
    %3 = vector.load %arg3[%c0_4, %c0_5] : memref<1x32xf32, #tpu.memory_space<vmem>>, vector<1x32xf32>
    %cst = arith.constant dense<0.000000e+00> : vector<16xf32>
    %4 = vector.multi_reduction <add>, %1, %cst [1] : vector<16x32xf32> to vector<16xf32>
    %5 = vector.shape_cast %4 : vector<16xf32> to vector<16x1xf32>
    %cst_6 = arith.constant 3.200000e+01 : f32
    %6 = vector.broadcast %cst_6 : f32 to vector<16x1xf32>
    %7 = arith.divf %5, %6 : vector<16x1xf32>
    %8 = arith.mulf %1, %1 : vector<16x32xf32>
    %cst_7 = arith.constant dense<0.000000e+00> : vector<16xf32>
    %9 = vector.multi_reduction <add>, %8, %cst_7 [1] : vector<16x32xf32> to vector<16xf32>
    %10 = vector.shape_cast %9 : vector<16xf32> to vector<16x1xf32>
    %cst_8 = arith.constant 3.200000e+01 : f32
    %11 = vector.broadcast %cst_8 : f32 to vector<16x1xf32>
    %12 = arith.divf %10, %11 : vector<16x1xf32>
    %13 = arith.mulf %7, %7 : vector<16x1xf32>
    %14 = arith.subf %12, %13 : vector<16x1xf32>
    %cst_9 = arith.constant 0.000000e+00 : f32
    %15 = vector.broadcast %cst_9 : f32 to vector<16x1xf32>
    %16 = arith.maximumf %14, %15 : vector<16x1xf32>
    %17 = vector.broadcast %7 : vector<16x1xf32> to vector<16x32xf32>
    %18 = arith.subf %1, %17 : vector<16x32xf32>
    %cst_10 = arith.constant 9.99999974E-6 : f32
    %19 = vector.broadcast %cst_10 : f32 to vector<16x1xf32>
    %20 = arith.addf %16, %19 : vector<16x1xf32>
    %21 = math.rsqrt %20 : vector<16x1xf32>
    %22 = vector.broadcast %21 : vector<16x1xf32> to vector<16x32xf32>
    %23 = arith.mulf %18, %22 : vector<16x32xf32>
    %24 = vector.broadcast %2 : vector<1x32xf32> to vector<16x32xf32>
    %25 = arith.mulf %23, %24 : vector<16x32xf32>
    %26 = vector.broadcast %3 : vector<1x32xf32> to vector<16x32xf32>
    %27 = arith.addf %25, %26 : vector<16x32xf32>
    %c0_11 = arith.constant 0 : index
    %c0_12 = arith.constant 0 : index
    %28 = vector.load %arg4[%c0_11, %c0_12] : memref<32x32xf32, #tpu.memory_space<vmem>>, vector<32x32xf32>
    %cst_13 = arith.constant dense<0.000000e+00> : vector<16x32xf32>
    %29 = tpu.matmul %27, %28, %cst_13 {dimension_numbers = #tpu.dot_dimension_numbers<[1], [0], [0], [1], [0, 0, 1, 1], [], []>} : vector<16x32xf32>, vector<32x32xf32>, vector<16x32xf32> -> vector<16x32xf32>
    %cst_14 = arith.constant 5.000000e-01 : f32
    %30 = vector.broadcast %cst_14 : f32 to vector<16x32xf32>
    %31 = arith.mulf %30, %29 : vector<16x32xf32>
    %cst_15 = arith.constant 0.707106769 : f32
    %32 = vector.broadcast %cst_15 : f32 to vector<16x32xf32>
    %33 = arith.mulf %29, %32 : vector<16x32xf32>
    %34 = math.erf %33 : vector<16x32xf32>
    %cst_16 = arith.constant 1.000000e+00 : f32
    %35 = vector.broadcast %cst_16 : f32 to vector<16x32xf32>
    %36 = arith.addf %35, %34 : vector<16x32xf32>
    %37 = arith.mulf %31, %36 : vector<16x32xf32>
    %c0_17 = arith.constant 0 : index
    %c0_18 = arith.constant 0 : index
    %38 = vector.load %arg5[%c0_17, %c0_18] : memref<1x32xf32, #tpu.memory_space<vmem>>, vector<1x32xf32>
    %39 = vector.broadcast %38 : vector<1x32xf32> to vector<16x32xf32>
    %40 = arith.mulf %37, %39 : vector<16x32xf32>
    %41 = vector.shape_cast %40 : vector<16x32xf32> to vector<2x8x32xf32>
    %cst_19 = arith.constant dense<0.000000e+00> : vector<2x8xf32>
    %42 = vector.multi_reduction <add>, %41, %cst_19 [2] : vector<2x8x32xf32> to vector<2x8xf32>
    %cst_20 = arith.constant dense<0xFF800000> : vector<2xf32>
    %43 = vector.multi_reduction <maximumf>, %42, %cst_20 [1] : vector<2x8xf32> to vector<2xf32>
    %44 = vector.shape_cast %43 : vector<2xf32> to vector<2x1xf32>
    %45 = vector.broadcast %44 : vector<2x1xf32> to vector<2x8xf32>
    %46 = arith.subf %42, %45 : vector<2x8xf32>
    %47 = math.exp %46 : vector<2x8xf32>
    %cst_21 = arith.constant dense<0.000000e+00> : vector<2xf32>
    %48 = vector.multi_reduction <add>, %47, %cst_21 [1] : vector<2x8xf32> to vector<2xf32>
    %49 = vector.shape_cast %48 : vector<2xf32> to vector<2x1xf32>
    %50 = vector.broadcast %49 : vector<2x1xf32> to vector<2x8xf32>
    %51 = arith.divf %47, %50 : vector<2x8xf32>
    %52 = vector.shape_cast %51 : vector<2x8xf32> to vector<2x8x1xf32>
    %53 = vector.broadcast %52 : vector<2x8x1xf32> to vector<2x8x32xf32>
    %54 = arith.mulf %53, %0 : vector<2x8x32xf32>
    %cst_22 = arith.constant dense<0.000000e+00> : vector<2x32xf32>
    %55 = vector.multi_reduction <add>, %54, %cst_22 [1] : vector<2x8x32xf32> to vector<2x32xf32>
    %c0_23 = arith.constant 0 : index
    %c0_24 = arith.constant 0 : index
    %56 = vector.load %arg6[%c0_23, %c0_24] : memref<1x32xf32, #tpu.memory_space<vmem>>, vector<1x32xf32>
    %c0_25 = arith.constant 0 : index
    %c0_26 = arith.constant 0 : index
    %57 = vector.load %arg7[%c0_25, %c0_26] : memref<1x32xf32, #tpu.memory_space<vmem>>, vector<1x32xf32>
    %cst_27 = arith.constant dense<0.000000e+00> : vector<2xf32>
    %58 = vector.multi_reduction <add>, %55, %cst_27 [1] : vector<2x32xf32> to vector<2xf32>
    %59 = vector.shape_cast %58 : vector<2xf32> to vector<2x1xf32>
    %cst_28 = arith.constant 3.200000e+01 : f32
    %60 = vector.broadcast %cst_28 : f32 to vector<2x1xf32>
    %61 = arith.divf %59, %60 : vector<2x1xf32>
    %62 = arith.mulf %55, %55 : vector<2x32xf32>
    %cst_29 = arith.constant dense<0.000000e+00> : vector<2xf32>
    %63 = vector.multi_reduction <add>, %62, %cst_29 [1] : vector<2x32xf32> to vector<2xf32>
    %64 = vector.shape_cast %63 : vector<2xf32> to vector<2x1xf32>
    %cst_30 = arith.constant 3.200000e+01 : f32
    %65 = vector.broadcast %cst_30 : f32 to vector<2x1xf32>
    %66 = arith.divf %64, %65 : vector<2x1xf32>
    %67 = arith.mulf %61, %61 : vector<2x1xf32>
    %68 = arith.subf %66, %67 : vector<2x1xf32>
    %cst_31 = arith.constant 0.000000e+00 : f32
    %69 = vector.broadcast %cst_31 : f32 to vector<2x1xf32>
    %70 = arith.maximumf %68, %69 : vector<2x1xf32>
    %71 = vector.broadcast %61 : vector<2x1xf32> to vector<2x32xf32>
    %72 = arith.subf %55, %71 : vector<2x32xf32>
    %cst_32 = arith.constant 9.99999974E-6 : f32
    %73 = vector.broadcast %cst_32 : f32 to vector<2x1xf32>
    %74 = arith.addf %70, %73 : vector<2x1xf32>
    %75 = math.rsqrt %74 : vector<2x1xf32>
    %76 = vector.broadcast %75 : vector<2x1xf32> to vector<2x32xf32>
    %77 = arith.mulf %72, %76 : vector<2x32xf32>
    %78 = vector.broadcast %56 : vector<1x32xf32> to vector<2x32xf32>
    %79 = arith.mulf %77, %78 : vector<2x32xf32>
    %80 = vector.broadcast %57 : vector<1x32xf32> to vector<2x32xf32>
    %81 = arith.addf %79, %80 : vector<2x32xf32>
    %c0_33 = arith.constant 0 : index
    %c0_34 = arith.constant 0 : index
    %82 = vector.load %arg8[%c0_33, %c0_34] : memref<32x128xf32, #tpu.memory_space<vmem>>, vector<32x128xf32>
    %cst_35 = arith.constant dense<0.000000e+00> : vector<2x128xf32>
    %83 = tpu.matmul %81, %82, %cst_35 {dimension_numbers = #tpu.dot_dimension_numbers<[1], [0], [0], [1], [0, 0, 1, 1], [], []>} : vector<2x32xf32>, vector<32x128xf32>, vector<2x128xf32> -> vector<2x128xf32>
    %c0_36 = arith.constant 0 : index
    %c0_37 = arith.constant 0 : index
    %84 = vector.load %arg9[%c0_36, %c0_37] : memref<1x128xf32, #tpu.memory_space<vmem>>, vector<1x128xf32>
    %85 = vector.broadcast %84 : vector<1x128xf32> to vector<2x128xf32>
    %86 = arith.addf %83, %85 : vector<2x128xf32>
    %c0_38 = arith.constant 0 : index
    %c0_39 = arith.constant 0 : index
    %87 = vector.load %arg10[%c0_38, %c0_39] : memref<2x128xf32, #tpu.memory_space<vmem>>, vector<2x128xf32>
    tpu.vector_store %arg10[%c0_38, %c0_39], %86 {strides = array<i32>} : memref<2x128xf32, #tpu.memory_space<vmem>>, vector<2x128xf32>,
    return
  }
  func.func @transform_0(%arg0: i32) -> (i32, i32, i32) {
    %c0_i32 = arith.constant 0 : i32
    %c0_i32_0 = arith.constant 0 : i32
    %c0_i32_1 = arith.constant 0 : i32
    return %arg0, %c0_i32, %c0_i32_0 : i32, i32, i32
  }
  func.func @transform_1(%arg0: i32) -> (i32, i32) {
    %c0_i32 = arith.constant 0 : i32
    %c0_i32_0 = arith.constant 0 : i32
    %c0_i32_1 = arith.constant 0 : i32
    return %c0_i32, %c0_i32_0 : i32, i32
  }
  func.func @transform_2(%arg0: i32) -> (i32, i32) {
    %c0_i32 = arith.constant 0 : i32
    %c0_i32_0 = arith.constant 0 : i32
    %c0_i32_1 = arith.constant 0 : i32
    return %c0_i32, %c0_i32_0 : i32, i32
  }
  func.func @transform_3(%arg0: i32) -> (i32, i32) {
    %c0_i32 = arith.constant 0 : i32
    %c0_i32_0 = arith.constant 0 : i32
    %c0_i32_1 = arith.constant 0 : i32
    return %c0_i32, %c0_i32_0 : i32, i32
  }
  func.func @transform_4(%arg0: i32) -> (i32, i32) {
    %c0_i32 = arith.constant 0 : i32
    %c0_i32_0 = arith.constant 0 : i32
    %c0_i32_1 = arith.constant 0 : i32
    return %c0_i32, %c0_i32_0 : i32, i32
  }
  func.func @transform_5(%arg0: i32) -> (i32, i32) {
    %c0_i32 = arith.constant 0 : i32
    %c0_i32_0 = arith.constant 0 : i32
    %c0_i32_1 = arith.constant 0 : i32
    return %c0_i32, %c0_i32_0 : i32, i32
  }
  func.func @transform_6(%arg0: i32) -> (i32, i32) {
    %c0_i32 = arith.constant 0 : i32
    %c0_i32_0 = arith.constant 0 : i32
    %c0_i32_1 = arith.constant 0 : i32
    return %c0_i32, %c0_i32_0 : i32, i32
  }
  func.func @transform_7(%arg0: i32) -> (i32, i32) {
    %c0_i32 = arith.constant 0 : i32
    %c0_i32_0 = arith.constant 0 : i32
    %c0_i32_1 = arith.constant 0 : i32
    return %c0_i32, %c0_i32_0 : i32, i32
  }
  func.func @transform_8(%arg0: i32) -> (i32, i32) {
    %c0_i32 = arith.constant 0 : i32
    %c0_i32_0 = arith.constant 0 : i32
    %c0_i32_1 = arith.constant 0 : i32
    return %c0_i32, %c0_i32_0 : i32, i32
  }
  func.func @transform_9(%arg0: i32) -> (i32, i32) {
    %c0_i32 = arith.constant 0 : i32
    %c0_i32_0 = arith.constant 0 : i32
    return %arg0, %c0_i32 : i32, i32
  }
}

</mosaic_0001>

<llo_original>
// kernel: tpu_custom_call.1
$region0: #{tpu_custom_call.1}
  #allocation0 [shape = 'u32[]', space=smem, size = 0x4, offset = 0x4, fixed_abs, tag = 'smem constant byte address 0x4 - core index']
  #allocation1 [shape = 'u32[72,128]{1,0:T(1,128)}', space=vmem, size = 0x9000, scoped, tag = 'internal scratch']
  %s0 = inlined_call_operand.hbm [shape: f32[2,8,32], index: 0, kind: input, shape index: {}]
  %s1 = inlined_call_operand.hbm [shape: f32[1,32], index: 1, kind: input, shape index: {}]
  %s2 = inlined_call_operand.vmem [shape: f32[1,32], index: 2, kind: input, shape index: {}]
  %s3 = inlined_call_operand.hbm [shape: f32[32,32], index: 3, kind: input, shape index: {}]
  %s4 = inlined_call_operand.vmem [shape: f32[1,32], index: 4, kind: input, shape index: {}]
  %s5 = inlined_call_operand.vmem [shape: f32[1,32], index: 5, kind: input, shape index: {}]
  %s6 = inlined_call_operand.vmem [shape: f32[1,32], index: 6, kind: input, shape index: {}]
  %s7 = inlined_call_operand.hbm [shape: f32[32,128], index: 7, kind: input, shape index: {}]
  %s8 = inlined_call_operand.vmem [shape: f32[1,128], index: 8, kind: input, shape index: {}]
  %s9 = inlined_call_operand.hbm [shape: f32[2,128], index: 9, kind: output, shape index: {}]
  %s10 = sld [smem:[#allocation0]]
  $region62: #{tpu_custom_call.1} parent=0
    _
  %s12 = ssub.s32 1, %s10
  %s13 = scalar_select 0, %s12, %s10
  $region1: #{tpu_custom_call.1} parent=0
    #allocation2 [shape = 'u8[8192]{0}', space=vmem, size = 0x2000, scoped, tag = 'input window, operand 0, single buffered']
    #allocation3 [shape = 's32[1]{0}', space=sflag, size = 0x4, scoped, tag = 'scoped memory for tpu_custom_call.1']
    #allocation4 [shape = 's32[1]{0}', space=sflag, size = 0x4, scoped, tag = 'scoped memory for tpu_custom_call.1']
    #allocation5 [shape = 'u8[512]{0}', space=vmem, size = 0x400, scoped, tag = 'input window, operand 1, single buffered']
    #allocation6 [shape = 's32[1]{0}', space=sflag, size = 0x4, scoped, tag = 'scoped memory for tpu_custom_call.1']
    #allocation7 [shape = 'u8[16384]{0}', space=vmem, size = 0x4000, scoped, tag = 'input window, operand 3, single buffered']
    #allocation8 [shape = 'u8[16384]{0}', space=vmem, size = 0x4000, scoped, tag = 'input window, operand 7, single buffered']
    #allocation9 [shape = 's32[1]{0}', space=sflag, size = 0x4, scoped, tag = 'scoped memory for tpu_custom_call.1']
    #allocation10 [shape = 'u8[1024]{0}', space=vmem, size = 0x400, scoped, tag = 'output window, operand 0, single buffered']
    %14 = vsyncpa [#allocation3], 0
    %15 = vsyncpa [#allocation6], 0
    %16 = vsyncpa [#allocation9], 0
    %17 = vsyncpa [#allocation4], 0
    // Predicated region
    $region2: #{tpu_custom_call.1} parent=1 // pred_check
      _
    $region3: #{tpu_custom_call.1} parent=1 // pred_check_branch
      %19 = sbr.rel (0) target = $region5
    $region4: #{tpu_custom_call.1} parent=1 // pred_region
      %21 = vsyncadd [#allocation3], 0
      %s22 = sshll.u32 %s0, 4
      %s23 = int_to_ptr.hbm [resolvable:$true] %s22
      %s24 = sshll.u32 [#allocation2], 4
      %s25 = int_to_ptr.vmem [resolvable:$true] %s24
      %30 = dma.hbm_to_vmem [thread:$0]  %s23, 256, %s25, [#allocation3], 128, 128, 8
    $region5: #{tpu_custom_call.1} parent=1 // pred_fallthru
      _
    // Predicated region
    $region6: #{tpu_custom_call.1} parent=1 // pred_check
      _
    $region7: #{tpu_custom_call.1} parent=1 // pred_check_branch
      %32 = sbr.rel (0) target = $region9
    $region8: #{tpu_custom_call.1} parent=1 // pred_region
      %34 = vsyncadd [#allocation6], 0
      %s36 = sshll.u32 %s1, 4
      %s37 = int_to_ptr.hbm [resolvable:$true] %s36
      %s38 = sshll.u32 [#allocation5], 4
      %s39 = int_to_ptr.vmem [resolvable:$true] %s38
      %41 = dma.hbm_to_vmem [thread:$0]  %s37, 16, %s39, [#allocation6]
    $region9: #{tpu_custom_call.1} parent=1 // pred_fallthru
      _
    // Predicated region
    $region10: #{tpu_custom_call.1} parent=1 // pred_check
      _
    $region11: #{tpu_custom_call.1} parent=1 // pred_check_branch
      %43 = sbr.rel (0) target = $region13
    $region12: #{tpu_custom_call.1} parent=1 // pred_region
      _
    $region13: #{tpu_custom_call.1} parent=1 // pred_fallthru
      _
    // Predicated region
    $region14: #{tpu_custom_call.1} parent=1 // pred_check
      _
    $region15: #{tpu_custom_call.1} parent=1 // pred_check_branch
      %45 = sbr.rel (0) target = $region17
    $region16: #{tpu_custom_call.1} parent=1 // pred_region
      %47 = vsyncadd [#allocation6], 0
      %s48 = sshll.u32 %s3, 4
      %s49 = int_to_ptr.hbm [resolvable:$true] %s48
      %s50 = sshll.u32 [#allocation7], 4
      %s51 = int_to_ptr.vmem [resolvable:$true] %s50
      %56 = dma.hbm_to_vmem [thread:$0]  %s49, 512, %s51, [#allocation6], 128, 128, 8
    $region17: #{tpu_custom_call.1} parent=1 // pred_fallthru
      _
    // Predicated region
    $region18: #{tpu_custom_call.1} parent=1 // pred_check
      _
    $region19: #{tpu_custom_call.1} parent=1 // pred_check_branch
      %58 = sbr.rel (0) target = $region21
    $region20: #{tpu_custom_call.1} parent=1 // pred_region
      _
    $region21: #{tpu_custom_call.1} parent=1 // pred_fallthru
      _
    // Predicated region
    $region22: #{tpu_custom_call.1} parent=1 // pred_check
      _
    $region23: #{tpu_custom_call.1} parent=1 // pred_check_branch
      %60 = sbr.rel (0) target = $region25
    $region24: #{tpu_custom_call.1} parent=1 // pred_region
      _
    $region25: #{tpu_custom_call.1} parent=1 // pred_fallthru
      _
    // Predicated region
    $region26: #{tpu_custom_call.1} parent=1 // pred_check
      _
    $region27: #{tpu_custom_call.1} parent=1 // pred_check_branch
      %62 = sbr.rel (0) target = $region29
    $region28: #{tpu_custom_call.1} parent=1 // pred_region
      _
    $region29: #{tpu_custom_call.1} parent=1 // pred_fallthru
      _
    // Predicated region
    $region30: #{tpu_custom_call.1} parent=1 // pred_check
      _
    $region31: #{tpu_custom_call.1} parent=1 // pred_check_branch
      %64 = sbr.rel (0) target = $region33
    $region32: #{tpu_custom_call.1} parent=1 // pred_region
      %66 = vsyncadd [#allocation9], 0
      %s67 = sshll.u32 %s7, 4
      %s68 = int_to_ptr.hbm [resolvable:$true] %s67
      %s69 = sshll.u32 [#allocation8], 4
      %s70 = int_to_ptr.vmem [resolvable:$true] %s69
      %75 = dma.hbm_to_vmem [thread:$0]  %s68, 512, %s70, [#allocation9], 128, 128, 8
    $region33: #{tpu_custom_call.1} parent=1 // pred_fallthru
      _
    // Predicated region
    $region34: #{tpu_custom_call.1} parent=1 // pred_check
      _
    $region35: #{tpu_custom_call.1} parent=1 // pred_check_branch
      %77 = sbr.rel (0) target = $region37
    $region36: #{tpu_custom_call.1} parent=1 // pred_region
      _
    $region37: #{tpu_custom_call.1} parent=1 // pred_fallthru
      _
    // Predicated region
    $region38: #{tpu_custom_call.1} parent=1 // pred_check
      _
    $region39: #{tpu_custom_call.1} parent=1 // pred_check_branch
      %79 = sbr.rel (0) target = $region41
    $region40: #{tpu_custom_call.1} parent=1 // pred_region
      %81 = dma.done [#allocation3], 256
    $region41: #{tpu_custom_call.1} parent=1 // pred_fallthru
      _
    // Predicated region
    $region42: #{tpu_custom_call.1} parent=1 // pred_check
      _
    $region43: #{tpu_custom_call.1} parent=1 // pred_check_branch
      %83 = sbr.rel (0) target = $region45
    $region44: #{tpu_custom_call.1} parent=1 // pred_region
      %85 = dma.done [#allocation6], 16
    $region45: #{tpu_custom_call.1} parent=1 // pred_fallthru
      _
    // Predicated region
    $region46: #{tpu_custom_call.1} parent=1 // pred_check
      _
    $region47: #{tpu_custom_call.1} parent=1 // pred_check_branch
      %87 = sbr.rel (0) target = $region49
    $region48: #{tpu_custom_call.1} parent=1 // pred_region
      %89 = dma.done [#allocation6], 512
    $region49: #{tpu_custom_call.1} parent=1 // pred_fallthru
      _
    // Predicated region
    $region50: #{tpu_custom_call.1} parent=1 // pred_check
      _
    $region51: #{tpu_custom_call.1} parent=1 // pred_check_branch
      %91 = sbr.rel (0) target = $region53
    $region52: #{tpu_custom_call.1} parent=1 // pred_region
      %93 = dma.done [#allocation9], 512
    $region53: #{tpu_custom_call.1} parent=1 // pred_fallthru
      _
    %v94 = vld [vmem:[#allocation2] sm:$0xff]
    %v95 = vld [vmem:[#allocation2 + $0x8] sm:$0xff]
    %v96 = vld [vmem:[#allocation5] sm:$0x1]
    %v97 = vld [vmem:[%s2] sm:$0x1]
    %vm98 = vcmask 261120
    %v99 = vsel %vm98, %v94, 0.0
    %100 = vadd.xlane.f32.xlu0 %v99
    %v101 = vpop.xlane.xlu0 %100
    %v102 = vsel %vm98, %v95, 0.0
    %103 = vadd.xlane.f32.xlu0 %v102
    %v104 = vpop.xlane.xlu0 %103
    %v105 = vrcp.pop 32.0
    %v106 = vmul.f32 32.0, %v105
    %v107 = vsub.f32 1.0, %v106
    %v108 = vmul.f32 %v105, %v107
    %v109 = vadd.f32 %v105, %v108
    %vm110 = vweird.f32 %v105
    %v111 = vsel %vm110, %v105, %v109
    %v112 = vmul.f32 %v101, %v111
    %v113 = vmul.f32 %v104, %v111
    %v114 = vmul.f32 %v94, %v94
    %v115 = vmul.f32 %v95, %v95
    %v116 = vsel %vm98, %v114, 0.0
    %117 = vadd.xlane.f32.xlu0 %v116
    %v118 = vpop.xlane.xlu0 %117
    %v119 = vsel %vm98, %v115, 0.0
    %120 = vadd.xlane.f32.xlu0 %v119
    %v121 = vpop.xlane.xlu0 %120
    %v122 = vmul.f32 %v118, %v111
    %v123 = vmul.f32 %v121, %v111
    %v124 = vmul.f32 %v112, %v112
    %v125 = vmul.f32 %v113, %v113
    %v126 = vsub.f32 %v122, %v124
    %v127 = vsub.f32 %v123, %v125
    %v128 = vmax.f32 %v126, 0.0
    %v129 = vmax.f32 %v127, 0.0
    %v130 = vsub.f32 %v94, %v112
    %v131 = vsub.f32 %v95, %v113
    %v132 = vadd.f32 %v128, 1e-05
    %v133 = vadd.f32 %v129, 1e-05
    %v134 = vrsqrt.pop %v132
    %v135 = vmul.f32 %v134, %v132
    %v136 = vmul.f32 %v135, %v134
    %v137 = vmul.f32 0.5, %v136
    %v138 = vsub.f32 1.5, %v137
    %v139 = vmul.f32 %v134, %v138
    %vm140 = vweird.f32 %v132
    %vm141 = vweird.f32 %v134
    %vm142 = vmor %vm140, %vm141
    %v143 = vsel %vm142, %v134, %v139
    %v144 = vrsqrt.pop %v133
    %v145 = vmul.f32 %v144, %v133
    %v146 = vmul.f32 %v145, %v144
    %v147 = vmul.f32 0.5, %v146
    %v148 = vsub.f32 1.5, %v147
    %v149 = vmul.f32 %v144, %v148
    %vm150 = vweird.f32 %v133
    %vm151 = vweird.f32 %v144
    %vm152 = vmor %vm150, %vm151
    %v153 = vsel %vm152, %v144, %v149
    %v154 = vmul.f32 %v130, %v143
    %v155 = vmul.f32 %v131, %v153
    %v157 = vperm.slane %v96, 0
    %v159 = vmul.f32 %v154, %v157
    %v160 = vmul.f32 %v155, %v157
    %v162 = vperm.slane %v97, 0
    %v164 = vadd.f32 %v159, %v162
    %v165 = vadd.f32 %v160, %v162
    %v166 = vld [vmem:[#allocation7] sm:$0xff]
    %v167 = vld [vmem:[#allocation7 + $0x8] sm:$0xff]
    %v168 = vld [vmem:[#allocation7 + $0x10] sm:$0xff]
    %v169 = vld [vmem:[#allocation7 + $0x18] sm:$0xff]
    %v171 = vsel %vm98, %v164, 0
    %v174 = vsel %vm98, %v165, 0
    %176 = vmatpush.msra.mxu0 0.0
    %177 = vmatpush.msra.mxu0 0.0
    %178 = vmatpush.msra.mxu0 0.0
    %179 = vmatpush.msra.mxu0 0.0
    %180 = vmatpush.msra.mxu0 0.0
    %181 = vmatpush.msra.mxu0 0.0
    %182 = vmatpush.msra.mxu0 0.0
    %183 = vmatpush.msra.mxu0 0.0
    %184 = vmatpush.msra.mxu0 0.0
    %185 = vmatpush.msra.mxu0 0.0
    %186 = vmatpush.msra.mxu0 0.0
    %187 = vmatpush.msra.mxu0 0.0
    %188 = vmatpush.msra.mxu0 %v169
    %189 = vmatpush.msra.mxu0 %v168
    %190 = vmatpush.msra.mxu0 %v167
    %191 = vmatpush.msra.mxu0 %v166
    %192 = vmatmul.f32.gmra.mxu0 %v171
    %v193 = vpop.f32.mrf.mxu0
    %v194 = vadd.f32 0.0, %v193
    %195 = vmatmul.f32.gmra.mxu0 %v174
    %v196 = vpop.f32.mrf.mxu0
    %v197 = vadd.f32 0.0, %v196
    %198 = vdwg.mxu0
    %v199 = vmul.f32 %v194, 0.5
    %v200 = vmul.f32 %v197, 0.5
    %v201 = vmul.f32 %v194, 0.70710677
    %v202 = vmul.f32 %v197, 0.70710677
    %v203 = vmul.f32 %v201, %v201
    %v204 = vmin.f32 16.0, %v203
    %v205 = vmul.f32 %v204, 2.1237322e-06
    %v206 = vadd.f32 %v205, 0.00028619796
    %v207 = vmul.f32 %v204, %v206
    %v208 = vadd.f32 %v207, 0.0036580483
    %v209 = vmul.f32 %v204, %v208
    %v210 = vadd.f32 %v209, 0.05243302
    %v211 = vmul.f32 %v204, %v210
    %v212 = vadd.f32 %v211, 0.18741608
    %v213 = vmul.f32 %v204, %v212
    %v214 = vadd.f32 %v213, 1.1283791
    %v215 = vmul.f32 %v201, %v214
    %v216 = vmul.f32 %v204, 3.8918573e-05
    %v217 = vadd.f32 %v216, 0.001143296
    %v218 = vmul.f32 %v204, %v217
    %v219 = vadd.f32 %v218, 0.014752088
    %v220 = vmul.f32 %v204, %v219
    %v221 = vadd.f32 %v220, 0.112945676
    %v222 = vmul.f32 %v204, %v221
    %v223 = vadd.f32 %v222, 0.4994258
    %v224 = vmul.f32 %v204, %v223
    %v225 = vadd.f32 %v224, 1.0
    %v226 = vrcp.pop %v225
    %v227 = vmul.f32 %v225, %v226
    %v228 = vsub.f32 1.0, %v227
    %v229 = vmul.f32 %v226, %v228
    %v230 = vadd.f32 %v226, %v229
    %vm231 = vweird.f32 %v225
    %vm232 = vweird.f32 %v226
    %vm233 = vmor %vm231, %vm232
    %v234 = vsel %vm233, %v226, %v230
    %v235 = vand.u32 2147483647, %v225
    %vm236 = vcmp.eq.f32.partialorder %v235, 8.507059e+37
    %v237 = vand.u32 %v225, 2147483648
    %v238 = vor.u32 1.1754944e-38, %v237
    %v239 = vsel %vm236, %v238, %v234
    %v240 = vmul.f32 %v215, %v239
    %v241 = vmin.f32 %v240, 1.0
    %v242 = vmax.f32 %v241, -1.0
    %v243 = vmul.f32 %v202, %v202
    %v244 = vmin.f32 16.0, %v243
    %v245 = vmul.f32 %v244, 2.1237322e-06
    %v246 = vadd.f32 %v245, 0.00028619796
    %v247 = vmul.f32 %v244, %v246
    %v248 = vadd.f32 %v247, 0.0036580483
    %v249 = vmul.f32 %v244, %v248
    %v250 = vadd.f32 %v249, 0.05243302
    %v251 = vmul.f32 %v244, %v250
    %v252 = vadd.f32 %v251, 0.18741608
    %v253 = vmul.f32 %v244, %v252
    %v254 = vadd.f32 %v253, 1.1283791
    %v255 = vmul.f32 %v202, %v254
    %v256 = vmul.f32 %v244, 3.8918573e-05
    %v257 = vadd.f32 %v256, 0.001143296
    %v258 = vmul.f32 %v244, %v257
    %v259 = vadd.f32 %v258, 0.014752088
    %v260 = vmul.f32 %v244, %v259
    %v261 = vadd.f32 %v260, 0.112945676
    %v262 = vmul.f32 %v244, %v261
    %v263 = vadd.f32 %v262, 0.4994258
    %v264 = vmul.f32 %v244, %v263
    %v265 = vadd.f32 %v264, 1.0
    %v266 = vrcp.pop %v265
    %v267 = vmul.f32 %v265, %v266
    %v268 = vsub.f32 1.0, %v267
    %v269 = vmul.f32 %v266, %v268
    %v270 = vadd.f32 %v266, %v269
    %vm271 = vweird.f32 %v265
    %vm272 = vweird.f32 %v266
    %vm273 = vmor %vm271, %vm272
    %v274 = vsel %vm273, %v266, %v270
    %v275 = vand.u32 2147483647, %v265
    %vm276 = vcmp.eq.f32.partialorder %v275, 8.507059e+37
    %v277 = vand.u32 %v265, 2147483648
    %v278 = vor.u32 1.1754944e-38, %v277
    %v279 = vsel %vm276, %v278, %v274
    %v280 = vmul.f32 %v255, %v279
    %v281 = vmin.f32 %v280, 1.0
    %v282 = vmax.f32 %v281, -1.0
    %v283 = vadd.f32 %v242, 1.0
    %v284 = vadd.f32 %v282, 1.0
    %v285 = vmul.f32 %v199, %v283
    %v286 = vmul.f32 %v200, %v284
    %v287 = vld [vmem:[%s4] sm:$0x1]
    %v289 = vperm.slane %v287, 0
    %v291 = vmul.f32 %v285, %v289
    %v292 = vmul.f32 %v286, %v289
    %v293 = vsel %vm98, %v291, 0.0
    %294 = vadd.xlane.f32.xlu0 %v293
    %v295 = vpop.xlane.xlu0 %294
    %v296 = vsel %vm98, %v292, 0.0
    %297 = vadd.xlane.f32.xlu0 %v296
    %v298 = vpop.xlane.xlu0 %297
    %v301 = vlaneseq
    %v302 = vand.u32 %v301, 127
    %v303 = vperm.slane %v295, %v302
    %v304 = vperm.slane %v298, %v302
    %vm305 = vcmask 1041409
    %v306 = vsel %vm305, %v304, %v303
    %vm308 = vcmask 58368
    %v309 = vsel %vm308, %v306, -inf
    %310 = vmax.xlane.f32.xlu0 %v309
    %v311 = vpop.xlane.xlu0 %310
    %v313 = vperm.slane %v311, 0
    %v314 = vperm.slane %v311, 1
    %v317 = vsub.f32 %v295, %v313
    %v318 = vsub.f32 %v298, %v314
    %v319 = vmul.f32 %v317, 1.442695
    %v320 = vpow.pop %v319
    %v321 = vmul.f32 %v318, 1.442695
    %v322 = vpow.pop %v321
    %325 = vset.pattern.permute.xlu0 0
    %326 = vperm.xlu0 %325, %v320
    %v327 = vpop.permute.xlu0 %326
    %328 = vset.pattern.permute.xlu0 0
    %329 = vperm.xlu0 %328, %v322
    %v330 = vpop.permute.xlu0 %329
    %v331 = vperm.slane %v327, %v302
    %v332 = vperm.slane %v330, %v302
    %v333 = vsel %vm305, %v332, %v331
    %v335 = vsel %vm308, %v333, 0.0
    %336 = vadd.xlane.f32.xlu0 %v335
    %v337 = vpop.xlane.xlu0 %336
    %v339 = vperm.slane %v337, 0
    %v340 = vperm.slane %v337, 1
    %v343 = vrcp.pop %v339
    %v344 = vmul.f32 %v339, %v343
    %v345 = vsub.f32 1.0, %v344
    %v346 = vmul.f32 %v343, %v345
    %v347 = vadd.f32 %v343, %v346
    %vm348 = vweird.f32 %v339
    %vm349 = vweird.f32 %v343
    %vm350 = vmor %vm348, %vm349
    %v351 = vsel %vm350, %v343, %v347
    %v352 = vand.u32 2147483647, %v339
    %vm353 = vcmp.eq.f32.partialorder %v352, 8.507059e+37
    %v354 = vand.u32 %v339, 2147483648
    %v355 = vor.u32 1.1754944e-38, %v354
    %v356 = vsel %vm353, %v355, %v351
    %v357 = vmul.f32 %v320, %v356
    %v358 = vrcp.pop %v340
    %v359 = vmul.f32 %v340, %v358
    %v360 = vsub.f32 1.0, %v359
    %v361 = vmul.f32 %v358, %v360
    %v362 = vadd.f32 %v358, %v361
    %vm363 = vweird.f32 %v340
    %vm364 = vweird.f32 %v358
    %vm365 = vmor %vm363, %vm364
    %v366 = vsel %vm365, %v358, %v362
    %v367 = vand.u32 2147483647, %v340
    %vm368 = vcmp.eq.f32.partialorder %v367, 8.507059e+37
    %v369 = vand.u32 %v340, 2147483648
    %v370 = vor.u32 1.1754944e-38, %v369
    %v371 = vsel %vm368, %v370, %v366
    %v372 = vmul.f32 %v322, %v371
    %374 = vset.pattern.permute.xlu0 0
    %375 = vperm.xlu0 %374, %v357
    %v376 = vpop.permute.xlu0 %375
    %379 = vset.pattern.permute.xlu0 0
    %380 = vperm.xlu0 %379, %v372
    %v381 = vpop.permute.xlu0 %380
    %v383 = vmul.f32 %v376, %v94
    %v384 = vmul.f32 %v381, %v95
    %v385 = vsel %vm98, %v383, 0.0
    %v386 = vrot.slane %v385, 4
    %v387 = vadd.f32 %v385, %v386
    %v388 = vrot.slane %v387, 2
    %v389 = vadd.f32 %v387, %v388
    %v390 = vrot.slane %v389, 1
    %v391 = vadd.f32 %v389, %v390
    %v392 = vsel %vm98, %v384, 0.0
    %v393 = vrot.slane %v392, 4
    %v394 = vadd.f32 %v392, %v393
    %v395 = vrot.slane %v394, 2
    %v396 = vadd.f32 %v394, %v395
    %v397 = vrot.slane %v396, 1
    %v398 = vadd.f32 %v396, %v397
    %v399 = vld [vmem:[%s5] sm:$0x1]
    %v400 = vld [vmem:[%s6] sm:$0x1]
    %v403 = vsel %vm305, %v398, %v391
    %vm405 = vcmask 254976
    %v406 = vsel %vm405, %v403, 0.0
    %407 = vadd.xlane.f32.xlu0 %v406
    %v408 = vpop.xlane.xlu0 %407
    %v409 = vmul.f32 %v408, %v111
    %v410 = vmul.f32 %v391, %v391
    %v411 = vmul.f32 %v398, %v398
    %v414 = vsel %vm305, %v411, %v410
    %v416 = vsel %vm405, %v414, 0.0
    %417 = vadd.xlane.f32.xlu0 %v416
    %v418 = vpop.xlane.xlu0 %417
    %v419 = vmul.f32 %v418, %v111
    %v420 = vmul.f32 %v409, %v409
    %v421 = vsub.f32 %v419, %v420
    %v422 = vmax.f32 %v421, 0.0
    %v424 = vrot.slane %v409, 1
    %v427 = vsub.f32 %v391, %v409
    %v428 = vsub.f32 %v398, %v424
    %v429 = vadd.f32 %v422, 1e-05
    %v430 = vrsqrt.pop %v429
    %v431 = vmul.f32 %v430, %v429
    %v432 = vmul.f32 %v431, %v430
    %v433 = vmul.f32 0.5, %v432
    %v434 = vsub.f32 1.5, %v433
    %v435 = vmul.f32 %v430, %v434
    %vm436 = vweird.f32 %v429
    %vm437 = vweird.f32 %v430
    %vm438 = vmor %vm436, %vm437
    %v439 = vsel %vm438, %v430, %v435
    %v441 = vrot.slane %v439, 1
    %v444 = vmul.f32 %v427, %v439
    %v445 = vmul.f32 %v428, %v441
    %v447 = vperm.slane %v399, 0
    %v449 = vmul.f32 %v444, %v447
    %v450 = vmul.f32 %v445, %v447
    %v452 = vperm.slane %v400, 0
    %v454 = vadd.f32 %v449, %v452
    %v455 = vadd.f32 %v450, %v452
    %v456 = vld [vmem:[#allocation8] sm:$0xff]
    %v457 = vld [vmem:[#allocation8 + $0x8] sm:$0xff]
    %v458 = vld [vmem:[#allocation8 + $0x10] sm:$0xff]
    %v459 = vld [vmem:[#allocation8 + $0x18] sm:$0xff]
    %v460 = vld [vmem:[%s8] sm:$0x1]
    %v462 = vperm.slane %v460, 0
    %v466 = vrot.slane %v455, 7
    %v467 = vsel %vm305, %v466, %v454
    %v468 = vsel %vm98, %v467, 0
    %470 = vmatpush.msra.mxu0 0.0
    %471 = vmatpush.msra.mxu0 0.0
    %472 = vmatpush.msra.mxu0 0.0
    %473 = vmatpush.msra.mxu0 0.0
    %474 = vmatpush.msra.mxu0 0.0
    %475 = vmatpush.msra.mxu0 0.0
    %476 = vmatpush.msra.mxu0 0.0
    %477 = vmatpush.msra.mxu0 0.0
    %478 = vmatpush.msra.mxu0 0.0
    %479 = vmatpush.msra.mxu0 0.0
    %480 = vmatpush.msra.mxu0 0.0
    %481 = vmatpush.msra.mxu0 0.0
    %482 = vmatpush.msra.mxu0 %v459
    %483 = vmatpush.msra.mxu0 %v458
    %484 = vmatpush.msra.mxu0 %v457
    %485 = vmatpush.msra.mxu0 %v456
    %486 = vmatmul.f32.gmra.mxu0 %v468
    %v487 = vpop.f32.mrf.mxu0
    %v488 = vadd.f32 %v462, %v487
    %489 = vdwg.mxu0
    %490 = vst [vmem:[#allocation10] sm:$0x3] %v488
    // Predicated region
    $region54: #{tpu_custom_call.1} parent=1 // pred_check
      _
    $region55: #{tpu_custom_call.1} parent=1 // pred_check_branch
      %492 = sbr.rel (0) target = $region57
    $region56: #{tpu_custom_call.1} parent=1 // pred_region
      %494 = vsyncadd [#allocation4], 0
      %s496 = sshll.u32 [#allocation10], 4
      %s497 = int_to_ptr.vmem [resolvable:$true] %s496
      %s498 = sshll.u32 %s9, 4
      %s499 = int_to_ptr.hbm [resolvable:$true] %s498
      %501 = dma.vmem_to_hbm [thread:$0]  %s497, 32, %s499, [#allocation4]
    $region57: #{tpu_custom_call.1} parent=1 // pred_fallthru
      _
    // Predicated region
    $region58: #{tpu_custom_call.1} parent=1 // pred_check
      _
    $region59: #{tpu_custom_call.1} parent=1 // pred_check_branch
      %503 = sbr.rel (0) target = $region61
    $region60: #{tpu_custom_call.1} parent=1 // pred_region
      %505 = dma.done [#allocation4], 32
    $region61: #{tpu_custom_call.1} parent=1 // pred_fallthru
      _
    %506 = vsyncpa [#allocation3], 1
    %507 = vsyncpa [#allocation6], 1
    %508 = vsyncpa [#allocation9], 1
    %509 = vsyncpa [#allocation4], 1

</llo_original>
